<compile_context>
chip_gen: v5e
topology: v5e:2x2
jax: 0.10.0
libtpu: 0.0.40
codegen_flags: <defaults>
</compile_context>

<pallas_src>
import functools

import jax
import jax.numpy as jnp
from jax.experimental import pallas as pl
from jax.experimental.pallas import tpu as pltpu


# ------------------------------ Pallas kernel --------------------------------

def _conv3x3_bn_silu(stage, w_ref, mask_l, mask_r, cin, H, W, halo):
    """3x3 'same' conv (+ folded BN bias) + SiLU as ONE stacked im2col matmul.

    stage  : VMEM f32 ref (Cmax, halo + H*W + halo); image in rows [0, cin) at
             lane offset `halo`, halo lanes zeroed (zero padding along H).
    w_ref  : (Cout, 1 + 9*cin) bf16 BN-folded weights; column 0 is the BN bias,
             column 1 + tap*cin + ci is w[cout, ci, dy+1, dx+1]*scale[cout]
             with tap = 3*(dy+1) + (dx+1).
    mask_l / mask_r : (1, H*W) f32 0/1 masks implementing the W-direction zero
             padding (dx = -1 / dx = +1 row wrap-around).
    Returns (Cout, H*W) float32.
    """
    HW = H * W
    parts = [jnp.ones((1, HW), jnp.float32)]          # bias row rides the matmul
    for tap in range(9):
        dy, dx = tap // 3 - 1, tap % 3 - 1
        # Window value at flat pixel i = h*W + w is image[h+dy, w+dx]:
        # a static lane-shifted slice of the zero-haloed staging buffer.
        off = halo + dy * W + dx
        win = stage[0:cin, off:off + HW]
        if dx == 1:        # w+1 == W would read the next row's first pixel
            win = win * mask_r
        elif dx == -1:     # w-1 < 0 would read the previous row's last pixel
            win = win * mask_l
        parts.append(win)
    # Stacked im2col RHS: one (Cout, 1+9*cin) x (1+9*cin, HW) MXU dot, bf16
    # operands, f32 accumulation.
    rhs = jnp.concatenate(parts, axis=0).astype(jnp.bfloat16)
    y = jnp.dot(w_ref[...], rhs, preferred_element_type=jnp.float32)
    return y * jax.nn.sigmoid(y)                      # SiLU in f32


def _bottleneck_kernel(x_ref, w1_ref, w2_ref, masks_ref, o_ref, stage,
                       *, H, W, add, c1, c_mid, nb):
    """Fused Bottleneck: cv2(cv1(x)) (+ x) for `nb` batch elems, (C, H*W) layout."""
    HW = H * W
    halo = (stage.shape[1] - HW) // 2
    c_all = stage.shape[0]

    mask_l = masks_ref[0:1, :]                        # (1, HW) f32 0/1
    mask_r = masks_ref[1:2, :]

    # Zero ONLY the two halo strips (H-direction zero padding); the interior is
    # fully overwritten below.  Done every grid step: each TensorCore has its
    # own scratch under "parallel" semantics, so no first-step-only guard.
    stage[:, 0:halo] = jnp.zeros((c_all, halo), stage.dtype)
    stage[:, halo + HW:] = jnp.zeros((c_all, halo), stage.dtype)

    for b in range(nb):                               # static unroll over batch block
        x = x_ref[b].astype(jnp.float32)              # (c1, HW) original precision

        # ---- cv1: stage input interior, one stacked conv matmul + SiLU ------
        stage[0:c1, halo:halo + HW] = x
        y1 = _conv3x3_bn_silu(stage, w1_ref, mask_l, mask_r, c1, H, W, halo)

        # ---- cv2: intermediate stays in VMEM, reuses the same staging buffer -
        stage[0:c_mid, halo:halo + HW] = y1
        y2 = _conv3x3_bn_silu(stage, w2_ref, mask_l, mask_r, c_mid, H, W, halo)

        if add:                                       # shortcut (c1 == c2), f32 x
            y2 = y2 + x
        o_ref[b] = y2.astype(o_ref.dtype)


# -------------------------------- wrapper -------------------------------------

def _fold_conv_bn_im2col(w_oihw, scale, bias):
    """OIHW 3x3 weights + BN scale/bias -> (Cout, 1 + 9*Cin) bf16 im2col matrix."""
    cout, cin, kh, kw = w_oihw.shape
    assert (kh, kw) == (3, 3), "only 3x3 kernels are supported"
    w = jnp.transpose(w_oihw, (0, 2, 3, 1)).reshape(cout, 9 * cin)   # tap-major, cin-minor
    w = w * scale[:, None]
    w_aug = jnp.concatenate([bias[:, None], w], axis=1)              # column 0 = BN bias
    return w_aug.astype(jnp.bfloat16)


@functools.partial(jax.jit, static_argnames=("shortcut",))
def bottleneck_forward(x_nchw, params, shortcut=True):
    """Bottleneck: cv2(cv1(x)) (+ x if shortcut and c1 == c2). NCHW in/out."""
    N, C1, H, W = x_nchw.shape
    C_ = params["w1"].shape[0]
    C2 = params["w2"].shape[0]
    add = bool(shortcut) and (C1 == C2)
    HW = H * W
    halo = ((W + 1 + 127) // 128) * 128               # lane-aligned halo >= W+1
    Cmax = max(C1, C_)

    # At most 2 grid steps: >= 2 parallel blocks keep both v7x TensorCores
    # busy; folding the batch into as few steps as possible amortises the
    # ~0.35us fixed per-step overhead on single-TC v5e/v6e.
    num_steps = 2 if (N >= 2 and N % 2 == 0) else 1
    nb = N // num_steps

    x_flat = x_nchw.reshape(N, C1, HW)                # pure view: NCHW, lane-dense
    w1_aug = _fold_conv_bn_im2col(params["w1"], params["s1"], params["b1"])
    w2_aug = _fold_conv_bn_im2col(params["w2"], params["s2"], params["b2"])

    # W-direction boundary masks, grid-invariant (row 0: col>=1, row 1: col<=W-2).
    col = jnp.arange(HW, dtype=jnp.int32) % W
    masks = jnp.stack([(col >= 1).astype(jnp.float32),
                       (col <= W - 2).astype(jnp.float32)], axis=0)   # (2, HW)

    kernel = functools.partial(_bottleneck_kernel, H=H, W=W, add=add,
                               c1=C1, c_mid=C_, nb=nb)

    out = pl.pallas_call(
        kernel,
        out_shape=jax.ShapeDtypeStruct((N, C2, HW), x_nchw.dtype),
        grid=(num_steps,),
        in_specs=[
            pl.BlockSpec((nb, C1, HW), lambda s: (s, 0, 0)),
            # Weights / masks are grid-invariant (constant index_map): DMA'd once.
            pl.BlockSpec((C_, 1 + 9 * C1), lambda s: (0, 0)),
            pl.BlockSpec((C2, 1 + 9 * C_), lambda s: (0, 0)),
            pl.BlockSpec((2, HW), lambda s: (0, 0)),
        ],
        out_specs=pl.BlockSpec((nb, C2, HW), lambda s: (s, 0, 0)),
        scratch_shapes=[
            pltpu.VMEM((Cmax, HW + 2 * halo), jnp.float32),   # shared staging buffer
        ],
        compiler_params=pltpu.CompilerParams(
            # Batch blocks across TensorCores; footprint is tiny, so the
            # default scoped-VMEM limit is left untouched (no hardcoded 64 MiB).
            dimension_semantics=("parallel",),
        ),
    )(x_flat, w1_aug, w2_aug, masks)
    return out.reshape(N, C2, H, W)


# --------------------------- deterministic params ----------------------------

def init_bottleneck_params(key, c1, c2, e=0.5, eps=1e-5):
    c_ = int(c2 * e)
    k = jax.random.split(key, 6)

    def bn_fold(kg, kb, c):
        gamma = 1.0 + 0.1 * jax.random.normal(kg, (c,), jnp.float32)
        beta = 0.1 * jax.random.normal(kb, (c,), jnp.float32)
        mean = jnp.zeros((c,), jnp.float32)            # fresh BN running stats
        var = jnp.ones((c,), jnp.float32)
        scale = gamma / jnp.sqrt(var + eps)
        bias = beta - mean * scale
        return scale, bias

    w1 = 0.1 * jax.random.normal(k[0], (c_, c1, 3, 3), jnp.float32)   # OIHW
    w2 = 0.1 * jax.random.normal(k[1], (c2, c_, 3, 3), jnp.float32)   # OIHW
    s1, b1 = bn_fold(k[2], k[3], c_)
    s2, b2 = bn_fold(k[4], k[5], c2)
    return {"w1": w1, "s1": s1, "b1": b1, "w2": w2, "s2": s2, "b2": b2}


# ------------------------------ JAX reference ---------------------------------

def _ref_conv_bn_silu(x_nchw, w_oihw, scale, bias):
    y = jax.lax.conv_general_dilated(
        x_nchw, w_oihw, (1, 1), "SAME",
        dimension_numbers=("NCHW", "OIHW", "NCHW"),
        precision=jax.lax.Precision.HIGHEST)
    y = y * scale[None, :, None, None] + bias[None, :, None, None]
    return y * jax.nn.sigmoid(y)


def bottleneck_ref(x_nchw, params, shortcut=True):
    c1 = x_nchw.shape[1]
    c2 = params["w2"].shape[0]
    y1 = _ref_conv_bn_silu(x_nchw, params["w1"], params["s1"], params["b1"])
    y2 = _ref_conv_bn_silu(y1, params["w2"], params["s2"], params["b2"])
    if shortcut and c1 == c2:
        y2 = y2 + x_nchw
    return y2


# ----------------------------------- main -------------------------------------

if __name__ == "__main__":
    key = jax.random.PRNGKey(0)
    kx, kp = jax.random.split(key)

    N, C1, H, W = 2, 4, 16, 16
    C2 = 4                       # c1 == c2 -> shortcut add is active
    x = jax.random.normal(kx, (N, C1, H, W), jnp.float32)   # PyTorch NCHW input

    params = init_bottleneck_params(kp, C1, C2, e=0.5)

    out = jax.block_until_ready(bottleneck_forward(x, params, shortcut=True))
    ref = jax.block_until_ready(bottleneck_ref(x, params, shortcut=True))

    assert out.shape == (N, C2, H, W), out.shape
    # Kernel uses bf16 MXU operands (f32 accumulation); reference is f32-exact.
    max_err = float(jnp.max(jnp.abs(out - ref)))
    assert max_err < 1e-2, f"max abs error {max_err}"

    print("KERNEL_OK")
</pallas_src>

<mosaic_0001>
module attributes {stable_mosaic.version = 11 : i64} {
  func.func @_bottleneck_kernel(%arg0: i32, %arg1: memref<1x4x256xf32, #tpu.memory_space<vmem>>, %arg2: memref<2x37xbf16, #tpu.memory_space<vmem>>, %arg3: memref<4x19xbf16, #tpu.memory_space<vmem>>, %arg4: memref<2x256xf32, #tpu.memory_space<vmem>>, %arg5: memref<1x4x256xf32, #tpu.memory_space<vmem>>, %arg6: memref<4x512xf32, #tpu.memory_space<vmem>>) attributes {dimension_semantics = [#tpu.dimension_semantics<parallel>], iteration_bounds = array<i64: 2>, scalar_prefetch = 0 : i64, scratch_operands = 1 : i64, tpu.core_type = #tpu.core_type<tc>, window_params = [{transform_indices = @transform_0, window_bounds = array<i64: 1, 4, 256>}, {pipeline_mode = #tpu.pipeline_mode<synchronous>, transform_indices = @transform_1, window_bounds = array<i64: 2, 37>}, {pipeline_mode = #tpu.pipeline_mode<synchronous>, transform_indices = @transform_2, window_bounds = array<i64: 4, 19>}, {pipeline_mode = #tpu.pipeline_mode<synchronous>, transform_indices = @transform_3, window_bounds = array<i64: 2, 256>}, {transform_indices = @transform_4, window_bounds = array<i64: 1, 4, 256>}]} {
    %c0 = arith.constant 0 : index
    %c0_0 = arith.constant 0 : index
    %0 = vector.load %arg4[%c0, %c0_0] : memref<2x256xf32, #tpu.memory_space<vmem>>, vector<1x256xf32>
    %c1 = arith.constant 1 : index
    %c0_1 = arith.constant 0 : index
    %1 = vector.load %arg4[%c1, %c0_1] : memref<2x256xf32, #tpu.memory_space<vmem>>, vector<1x256xf32>
    %cst = arith.constant 0.000000e+00 : f32
    %2 = vector.broadcast %cst : f32 to vector<4x128xf32>
    %c0_2 = arith.constant 0 : index
    %c0_3 = arith.constant 0 : index
    %3 = vector.load %arg6[%c0_2, %c0_3] : memref<4x512xf32, #tpu.memory_space<vmem>>, vector<4x128xf32>
    tpu.vector_store %arg6[%c0_2, %c0_3], %2 {strides = array<i32>} : memref<4x512xf32, #tpu.memory_space<vmem>>, vector<4x128xf32>,
    %cst_4 = arith.constant 0.000000e+00 : f32
    %4 = vector.broadcast %cst_4 : f32 to vector<4x128xf32>
    %c0_5 = arith.constant 0 : index
    %c384 = arith.constant 384 : index
    %5 = vector.load %arg6[%c0_5, %c384] : memref<4x512xf32, #tpu.memory_space<vmem>>, vector<4x128xf32>
    tpu.vector_store %arg6[%c0_5, %c384], %4 {strides = array<i32>} : memref<4x512xf32, #tpu.memory_space<vmem>>, vector<4x128xf32>,
    %c0_6 = arith.constant 0 : index
    %c0_7 = arith.constant 0 : index
    %c0_8 = arith.constant 0 : index
    %6 = vector.load %arg1[%c0_6, %c0_7, %c0_8] : memref<1x4x256xf32, #tpu.memory_space<vmem>>, vector<1x4x256xf32>
    %7 = vector.shape_cast %6 : vector<1x4x256xf32> to vector<4x256xf32>
    %c0_9 = arith.constant 0 : index
    %c128 = arith.constant 128 : index
    %8 = vector.load %arg6[%c0_9, %c128] : memref<4x512xf32, #tpu.memory_space<vmem>>, vector<4x256xf32>
    tpu.vector_store %arg6[%c0_9, %c128], %7 {strides = array<i32>} : memref<4x512xf32, #tpu.memory_space<vmem>>, vector<4x256xf32>,
    %cst_10 = arith.constant 1.000000e+00 : f32
    %9 = vector.broadcast %cst_10 : f32 to vector<1x256xf32>
    %c0_11 = arith.constant 0 : index
    %c111 = arith.constant 111 : index
    %10 = vector.load %arg6[%c0_11, %c111] : memref<4x512xf32, #tpu.memory_space<vmem>>, vector<4x256xf32>
    %11 = vector.broadcast %0 : vector<1x256xf32> to vector<4x256xf32>
    %12 = arith.mulf %10, %11 : vector<4x256xf32>
    %c0_12 = arith.constant 0 : index
    %c112 = arith.constant 112 : index
    %13 = vector.load %arg6[%c0_12, %c112] : memref<4x512xf32, #tpu.memory_space<vmem>>, vector<4x256xf32>
    %c0_13 = arith.constant 0 : index
    %c113 = arith.constant 113 : index
    %14 = vector.load %arg6[%c0_13, %c113] : memref<4x512xf32, #tpu.memory_space<vmem>>, vector<4x256xf32>
    %15 = vector.broadcast %1 : vector<1x256xf32> to vector<4x256xf32>
    %16 = arith.mulf %14, %15 : vector<4x256xf32>
    %c0_14 = arith.constant 0 : index
    %c127 = arith.constant 127 : index
    %17 = vector.load %arg6[%c0_14, %c127] : memref<4x512xf32, #tpu.memory_space<vmem>>, vector<4x256xf32>
    %18 = vector.broadcast %0 : vector<1x256xf32> to vector<4x256xf32>
    %19 = arith.mulf %17, %18 : vector<4x256xf32>
    %c0_15 = arith.constant 0 : index
    %c128_16 = arith.constant 128 : index
    %20 = vector.load %arg6[%c0_15, %c128_16] : memref<4x512xf32, #tpu.memory_space<vmem>>, vector<4x256xf32>
    %c0_17 = arith.constant 0 : index
    %c129 = arith.constant 129 : index
    %21 = vector.load %arg6[%c0_17, %c129] : memref<4x512xf32, #tpu.memory_space<vmem>>, vector<4x256xf32>
    %22 = vector.broadcast %1 : vector<1x256xf32> to vector<4x256xf32>
    %23 = arith.mulf %21, %22 : vector<4x256xf32>
    %c0_18 = arith.constant 0 : index
    %c143 = arith.constant 143 : index
    %24 = vector.load %arg6[%c0_18, %c143] : memref<4x512xf32, #tpu.memory_space<vmem>>, vector<4x256xf32>
    %25 = vector.broadcast %0 : vector<1x256xf32> to vector<4x256xf32>
    %26 = arith.mulf %24, %25 : vector<4x256xf32>
    %c0_19 = arith.constant 0 : index
    %c144 = arith.constant 144 : index
    %27 = vector.load %arg6[%c0_19, %c144] : memref<4x512xf32, #tpu.memory_space<vmem>>, vector<4x256xf32>
    %c0_20 = arith.constant 0 : index
    %c145 = arith.constant 145 : index
    %28 = vector.load %arg6[%c0_20, %c145] : memref<4x512xf32, #tpu.memory_space<vmem>>, vector<4x256xf32>
    %29 = vector.broadcast %1 : vector<1x256xf32> to vector<4x256xf32>
    %30 = arith.mulf %28, %29 : vector<4x256xf32>
    %31 = tpu.concatenate %9, %12, %13, %16, %19, %20, %23, %26, %27, %30 in 0 : vector<1x256xf32>, vector<4x256xf32>, vector<4x256xf32>, vector<4x256xf32>, vector<4x256xf32>, vector<4x256xf32>, vector<4x256xf32>, vector<4x256xf32>, vector<4x256xf32>, vector<4x256xf32> -> vector<37x256xf32>
    %32 = arith.truncf %31 : vector<37x256xf32> to vector<37x256xbf16>
    %c0_21 = arith.constant 0 : index
    %c0_22 = arith.constant 0 : index
    %33 = vector.load %arg2[%c0_21, %c0_22] : memref<2x37xbf16, #tpu.memory_space<vmem>>, vector<2x37xbf16>
    %cst_23 = arith.constant dense<0.000000e+00> : vector<2x256xf32>
    %34 = tpu.matmul %33, %32, %cst_23 {dimension_numbers = #tpu.dot_dimension_numbers<[1], [0], [0], [1], [0, 0, 1, 1], [], []>} : vector<2x37xbf16>, vector<37x256xbf16>, vector<2x256xf32> -> vector<2x256xf32>
    %35 = arith.negf %34 : vector<2x256xf32>
    %36 = math.exp %35 : vector<2x256xf32>
    %cst_24 = arith.constant 1.000000e+00 : f32
    %37 = vector.broadcast %cst_24 : f32 to vector<2x256xf32>
    %38 = arith.addf %37, %36 : vector<2x256xf32>
    %39 = arith.divf %37, %38 : vector<2x256xf32>
    %40 = arith.mulf %34, %39 : vector<2x256xf32>
    %c0_25 = arith.constant 0 : index
    %c128_26 = arith.constant 128 : index
    %41 = vector.load %arg6[%c0_25, %c128_26] : memref<4x512xf32, #tpu.memory_space<vmem>>, vector<2x256xf32>
    tpu.vector_store %arg6[%c0_25, %c128_26], %40 {strides = array<i32>} : memref<4x512xf32, #tpu.memory_space<vmem>>, vector<2x256xf32>,
    %cst_27 = arith.constant 1.000000e+00 : f32
    %42 = vector.broadcast %cst_27 : f32 to vector<1x256xf32>
    %c0_28 = arith.constant 0 : index
    %c111_29 = arith.constant 111 : index
    %43 = vector.load %arg6[%c0_28, %c111_29] : memref<4x512xf32, #tpu.memory_space<vmem>>, vector<2x256xf32>
    %44 = vector.broadcast %0 : vector<1x256xf32> to vector<2x256xf32>
    %45 = arith.mulf %43, %44 : vector<2x256xf32>
    %c0_30 = arith.constant 0 : index
    %c112_31 = arith.constant 112 : index
    %46 = vector.load %arg6[%c0_30, %c112_31] : memref<4x512xf32, #tpu.memory_space<vmem>>, vector<2x256xf32>
    %c0_32 = arith.constant 0 : index
    %c113_33 = arith.constant 113 : index
    %47 = vector.load %arg6[%c0_32, %c113_33] : memref<4x512xf32, #tpu.memory_space<vmem>>, vector<2x256xf32>
    %48 = vector.broadcast %1 : vector<1x256xf32> to vector<2x256xf32>
    %49 = arith.mulf %47, %48 : vector<2x256xf32>
    %c0_34 = arith.constant 0 : index
    %c127_35 = arith.constant 127 : index
    %50 = vector.load %arg6[%c0_34, %c127_35] : memref<4x512xf32, #tpu.memory_space<vmem>>, vector<2x256xf32>
    %51 = vector.broadcast %0 : vector<1x256xf32> to vector<2x256xf32>
    %52 = arith.mulf %50, %51 : vector<2x256xf32>
    %c0_36 = arith.constant 0 : index
    %c128_37 = arith.constant 128 : index
    %53 = vector.load %arg6[%c0_36, %c128_37] : memref<4x512xf32, #tpu.memory_space<vmem>>, vector<2x256xf32>
    %c0_38 = arith.constant 0 : index
    %c129_39 = arith.constant 129 : index
    %54 = vector.load %arg6[%c0_38, %c129_39] : memref<4x512xf32, #tpu.memory_space<vmem>>, vector<2x256xf32>
    %55 = vector.broadcast %1 : vector<1x256xf32> to vector<2x256xf32>
    %56 = arith.mulf %54, %55 : vector<2x256xf32>
    %c0_40 = arith.constant 0 : index
    %c143_41 = arith.constant 143 : index
    %57 = vector.load %arg6[%c0_40, %c143_41] : memref<4x512xf32, #tpu.memory_space<vmem>>, vector<2x256xf32>
    %58 = vector.broadcast %0 : vector<1x256xf32> to vector<2x256xf32>
    %59 = arith.mulf %57, %58 : vector<2x256xf32>
    %c0_42 = arith.constant 0 : index
    %c144_43 = arith.constant 144 : index
    %60 = vector.load %arg6[%c0_42, %c144_43] : memref<4x512xf32, #tpu.memory_space<vmem>>, vector<2x256xf32>
    %c0_44 = arith.constant 0 : index
    %c145_45 = arith.constant 145 : index
    %61 = vector.load %arg6[%c0_44, %c145_45] : memref<4x512xf32, #tpu.memory_space<vmem>>, vector<2x256xf32>
    %62 = vector.broadcast %1 : vector<1x256xf32> to vector<2x256xf32>
    %63 = arith.mulf %61, %62 : vector<2x256xf32>
    %64 = tpu.concatenate %42, %45, %46, %49, %52, %53, %56, %59, %60, %63 in 0 : vector<1x256xf32>, vector<2x256xf32>, vector<2x256xf32>, vector<2x256xf32>, vector<2x256xf32>, vector<2x256xf32>, vector<2x256xf32>, vector<2x256xf32>, vector<2x256xf32>, vector<2x256xf32> -> vector<19x256xf32>
    %65 = arith.truncf %64 : vector<19x256xf32> to vector<19x256xbf16>
    %c0_46 = arith.constant 0 : index
    %c0_47 = arith.constant 0 : index
    %66 = vector.load %arg3[%c0_46, %c0_47] : memref<4x19xbf16, #tpu.memory_space<vmem>>, vector<4x19xbf16>
    %cst_48 = arith.constant dense<0.000000e+00> : vector<4x256xf32>
    %67 = tpu.matmul %66, %65, %cst_48 {dimension_numbers = #tpu.dot_dimension_numbers<[1], [0], [0], [1], [0, 0, 1, 1], [], []>} : vector<4x19xbf16>, vector<19x256xbf16>, vector<4x256xf32> -> vector<4x256xf32>
    %68 = arith.negf %67 : vector<4x256xf32>
    %69 = math.exp %68 : vector<4x256xf32>
    %cst_49 = arith.constant 1.000000e+00 : f32
    %70 = vector.broadcast %cst_49 : f32 to vector<4x256xf32>
    %71 = arith.addf %70, %69 : vector<4x256xf32>
    %72 = arith.divf %70, %71 : vector<4x256xf32>
    %73 = arith.mulf %67, %72 : vector<4x256xf32>
    %74 = arith.addf %73, %7 : vector<4x256xf32>
    %c0_50 = arith.constant 0 : index
    %c0_51 = arith.constant 0 : index
    %c0_52 = arith.constant 0 : index
    %75 = vector.load %arg5[%c0_50, %c0_51, %c0_52] : memref<1x4x256xf32, #tpu.memory_space<vmem>>, vector<1x4x256xf32>
    %76 = vector.shape_cast %75 : vector<1x4x256xf32> to vector<4x256xf32>
    %77 = vector.shape_cast %74 : vector<4x256xf32> to vector<1x4x256xf32>
    tpu.vector_store %arg5[%c0_50, %c0_51, %c0_52], %77 {strides = array<i32>} : memref<1x4x256xf32, #tpu.memory_space<vmem>>, vector<1x4x256xf32>,
    return
  }
  func.func @transform_0(%arg0: i32) -> (i32, i32, i32) {
    %c0_i32 = arith.constant 0 : i32
    %c0_i32_0 = arith.constant 0 : i32
    %c0_i32_1 = arith.constant 0 : i32
    return %arg0, %c0_i32, %c0_i32_0 : i32, i32, i32
  }
  func.func @transform_1(%arg0: i32) -> (i32, i32) {
    %c0_i32 = arith.constant 0 : i32
    %c0_i32_0 = arith.constant 0 : i32
    %c0_i32_1 = arith.constant 0 : i32
    return %c0_i32, %c0_i32_0 : i32, i32
  }
  func.func @transform_2(%arg0: i32) -> (i32, i32) {
    %c0_i32 = arith.constant 0 : i32
    %c0_i32_0 = arith.constant 0 : i32
    %c0_i32_1 = arith.constant 0 : i32
    return %c0_i32, %c0_i32_0 : i32, i32
  }
  func.func @transform_3(%arg0: i32) -> (i32, i32) {
    %c0_i32 = arith.constant 0 : i32
    %c0_i32_0 = arith.constant 0 : i32
    %c0_i32_1 = arith.constant 0 : i32
    return %c0_i32, %c0_i32_0 : i32, i32
  }
  func.func @transform_4(%arg0: i32) -> (i32, i32, i32) {
    %c0_i32 = arith.constant 0 : i32
    %c0_i32_0 = arith.constant 0 : i32
    %c0_i32_1 = arith.constant 0 : i32
    return %arg0, %c0_i32, %c0_i32_0 : i32, i32, i32
  }
}

</mosaic_0001>

<llo_original>
// kernel: bottleneck_forward.1
$region0: #{bottleneck_forward.1}
  #allocation0 [shape = 'u32[]', space=smem, size = 0x4, offset = 0x4, fixed_abs, tag = 'smem constant byte address 0x4 - core index']
  #allocation1 [shape = 'u32[72,128]{1,0:T(1,128)}', space=vmem, size = 0x9000, scoped, tag = 'internal scratch']
  #allocation2 [shape = 'f32[4,512]{1,0:T(4,128)}', space=vmem, size = 0x2000, scoped, tag = 'scratch operand']
  %s0 = inlined_call_operand.vmem [shape: f32[2,4,256], index: 0, kind: input, shape index: {}]
  %s1 = inlined_call_operand.vmem [shape: bf16[2,37], index: 1, kind: input, shape index: {}]
  %s2 = inlined_call_operand.vmem [shape: bf16[4,19], index: 2, kind: input, shape index: {}]
  %s3 = inlined_call_operand.vmem [shape: f32[2,256], index: 3, kind: input, shape index: {}]
  %s4 = inlined_call_operand.vmem [shape: f32[2,4,256], index: 4, kind: output, shape index: {}]
  %s5 = sld [smem:[#allocation0]]
  $region49: #{bottleneck_forward.1} parent=0
    _
  %s7 = ssub.s32 1, %s5
  %s8 = scalar_select 0, %s7, %s5
  loop: start=0, step=1, limit=4
  $region2: #{bottleneck_forward.1} parent=0 // loop_pre_header
    _
  $region3: #{bottleneck_forward.1} parent=0 // loop_header
    %s10 = sphi 0, %s14
    %p11 = scmp.ge.s32.totalorder %s10, 4
    %s20 = sphi 0, %s22
    %s23 = sphi 0, %s20
    %s24 = sphi 0, %s23
    %s40 = sphi 0, %s24
    %s44 = sphi 0, %s44
    %s46 = sphi 0, %s44
    %s47 = sphi 0, %s46
    %s61 = sphi 0, %s47
    %s65 = sphi 0, %s65
    %s67 = sphi 0, %s65
    %s68 = sphi 0, %s67
    %s82 = sphi 0, %s68
    %s86 = sphi 0, %s86
    %s88 = sphi 0, %s86
    %s89 = sphi 0, %s88
    %s103 = sphi 0, %s89
    %s109 = sphi 0, %s111
    %s112 = sphi 0, %s109
    %s113 = sphi 0, %s112
    %s129 = sphi 0, %s113
  $region4: #{bottleneck_forward.1} parent=0 // loop_header_branch
    %13 = sbr.rel (%p11) target = $region8
  $region5: #{bottleneck_forward.1} parent=0 // loop_body
    %s15 = ssub.s32 %s10, 1
    %s16 = ssub.s32 %s10, 2
    %s17 = sadd.s32 %s10, 1
    %s18 = ssub.s32 %s10, %s17
    %p19 = scmp.eq.s32.totalorder %s18, 0
    %s21 = sadd.s32 %s20, 1
    %s22 = scalar_select %p19, %s20, %s21
    %p25 = pneg %p19
    %p26 = scmp.eq.s32.totalorder %s10, 1
    %p27 = por %p25, %p26
    %p28 = scmp.ne.s32.totalorder %s20, %s23
    %p29 = scmp.eq.s32.totalorder %s10, 0
    %p30 = por %p28, %p29
    %p31 = scmp.ne.s32.totalorder %s20, %s23
    %p32 = scmp.eq.s32.totalorder %s15, 1
    %p33 = por %p31, %p32
    %p34 = scmp.ne.s32.totalorder %s23, %s24
    %p35 = scmp.eq.s32.totalorder %s15, 0
    %p36 = por %p34, %p35
    %p37 = scmp.ne.s32.totalorder %s23, %s24
    %p38 = scmp.eq.s32.totalorder %s16, 1
    %p39 = por %p37, %p38
    %p41 = scmp.ne.s32.totalorder %s24, %s40
    %p42 = scmp.eq.s32.totalorder %s16, 0
    %p43 = por %p41, %p42
    %s45 = sadd.s32 %s44, 1
    %p48 = scmp.eq.s32.totalorder %s10, 1
    %p49 = scmp.ne.s32.totalorder %s44, %s46
    %p50 = scmp.eq.s32.totalorder %s10, 0
    %p51 = por %p49, %p50
    %p52 = scmp.ne.s32.totalorder %s44, %s46
    %p53 = scmp.eq.s32.totalorder %s15, 1
    %p54 = por %p52, %p53
    %p55 = scmp.ne.s32.totalorder %s46, %s47
    %p56 = scmp.eq.s32.totalorder %s15, 0
    %p57 = por %p55, %p56
    %p58 = scmp.ne.s32.totalorder %s46, %s47
    %p59 = scmp.eq.s32.totalorder %s16, 1
    %p60 = por %p58, %p59
    %p62 = scmp.ne.s32.totalorder %s47, %s61
    %p63 = scmp.eq.s32.totalorder %s16, 0
    %p64 = por %p62, %p63
    %s66 = sadd.s32 %s65, 1
    %p69 = scmp.eq.s32.totalorder %s10, 1
    %p70 = scmp.ne.s32.totalorder %s65, %s67
    %p71 = scmp.eq.s32.totalorder %s10, 0
    %p72 = por %p70, %p71
    %p73 = scmp.ne.s32.totalorder %s65, %s67
    %p74 = scmp.eq.s32.totalorder %s15, 1
    %p75 = por %p73, %p74
    %p76 = scmp.ne.s32.totalorder %s67, %s68
    %p77 = scmp.eq.s32.totalorder %s15, 0
    %p78 = por %p76, %p77
    %p79 = scmp.ne.s32.totalorder %s67, %s68
    %p80 = scmp.eq.s32.totalorder %s16, 1
    %p81 = por %p79, %p80
    %p83 = scmp.ne.s32.totalorder %s68, %s82
    %p84 = scmp.eq.s32.totalorder %s16, 0
    %p85 = por %p83, %p84
    %s87 = sadd.s32 %s86, 1
    %p90 = scmp.eq.s32.totalorder %s10, 1
    %p91 = scmp.ne.s32.totalorder %s86, %s88
    %p92 = scmp.eq.s32.totalorder %s10, 0
    %p93 = por %p91, %p92
    %p94 = scmp.ne.s32.totalorder %s86, %s88
    %p95 = scmp.eq.s32.totalorder %s15, 1
    %p96 = por %p94, %p95
    %p97 = scmp.ne.s32.totalorder %s88, %s89
    %p98 = scmp.eq.s32.totalorder %s15, 0
    %p99 = por %p97, %p98
    %p100 = scmp.ne.s32.totalorder %s88, %s89
    %p101 = scmp.eq.s32.totalorder %s16, 1
    %p102 = por %p100, %p101
    %p104 = scmp.ne.s32.totalorder %s89, %s103
    %p105 = scmp.eq.s32.totalorder %s16, 0
    %p106 = por %p104, %p105
    %s107 = ssub.s32 %s10, %s17
    %p108 = scmp.eq.s32.totalorder %s107, 0
    %s110 = sadd.s32 %s109, 1
    %s111 = scalar_select %p108, %s109, %s110
    %p114 = pneg %p108
    %p115 = scmp.eq.s32.totalorder %s10, 1
    %p116 = por %p114, %p115
    %p117 = scmp.ne.s32.totalorder %s109, %s112
    %p118 = scmp.eq.s32.totalorder %s10, 0
    %p119 = por %p117, %p118
    %p120 = scmp.ne.s32.totalorder %s109, %s112
    %p121 = scmp.eq.s32.totalorder %s15, 1
    %p122 = por %p120, %p121
    %p123 = scmp.ne.s32.totalorder %s112, %s113
    %p124 = scmp.eq.s32.totalorder %s15, 0
    %p125 = por %p123, %p124
    %p126 = scmp.ne.s32.totalorder %s112, %s113
    %p127 = scmp.eq.s32.totalorder %s16, 1
    %p128 = por %p126, %p127
    %p130 = scmp.ne.s32.totalorder %s113, %s129
    %p131 = scmp.eq.s32.totalorder %s16, 0
    %p132 = por %p130, %p131
    %p133 = scmp.le.s32.totalorder 1, %s10
    %p134 = scmp.lt.s32.totalorder %s10, 3
    %p135 = pnand %p133, %p134
    %p136 = pneg %p135
    // Predicated region
    $region9: #{bottleneck_forward.1} parent=5 // pred_check
      _
    $region10: #{bottleneck_forward.1} parent=5 // pred_check_branch
      %138 = sbr.rel (%p135) target = $region12
    $region11: #{bottleneck_forward.1} parent=5 // pred_region
      %s139 = ssub.s32 %s10, 1
      // Predicated region
      $region13: #{bottleneck_forward.1} parent=11 // pred_check
        %p140 = pneg %p57
      $region14: #{bottleneck_forward.1} parent=11 // pred_check_branch
        %142 = sbr.rel (%p140) target = $region16
      $region15: #{bottleneck_forward.1} parent=11 // pred_region
        _
      $region16: #{bottleneck_forward.1} parent=11 // pred_fallthru
        _
      // Predicated region
      $region17: #{bottleneck_forward.1} parent=11 // pred_check
        %p143 = pneg %p78
      $region18: #{bottleneck_forward.1} parent=11 // pred_check_branch
        %145 = sbr.rel (%p143) target = $region20
      $region19: #{bottleneck_forward.1} parent=11 // pred_region
        _
      $region20: #{bottleneck_forward.1} parent=11 // pred_fallthru
        _
      // Predicated region
      $region21: #{bottleneck_forward.1} parent=11 // pred_check
        %p146 = pneg %p99
      $region22: #{bottleneck_forward.1} parent=11 // pred_check_branch
        %148 = sbr.rel (%p146) target = $region24
      $region23: #{bottleneck_forward.1} parent=11 // pred_region
        _
      $region24: #{bottleneck_forward.1} parent=11 // pred_fallthru
        _
    $region12: #{bottleneck_forward.1} parent=5 // pred_fallthru
      _
    %p149 = scmp.lt.s32.totalorder %s10, 2
    // Predicated region
    $region25: #{bottleneck_forward.1} parent=5 // pred_check
      %p150 = pneg %p149
    $region26: #{bottleneck_forward.1} parent=5 // pred_check_branch
      %152 = sbr.rel (%p150) target = $region28
    $region27: #{bottleneck_forward.1} parent=5 // pred_region
      // Predicated region
      $region29: #{bottleneck_forward.1} parent=27 // pred_check
        %p153 = pneg %p30
      $region30: #{bottleneck_forward.1} parent=27 // pred_check_branch
        %155 = sbr.rel (%p153) target = $region32
      $region31: #{bottleneck_forward.1} parent=27 // pred_region
        %p156 = scmp.lt.s32.totalorder %s10, 1
        %s157 = scalar_select %p156, %s10, 1
        %s158 = smul.addr %s157, 2
        %s159 = smul.addr %s158, 4
        %s160 = scalar_lea.vmem %s0, %s159
      $region32: #{bottleneck_forward.1} parent=27 // pred_fallthru
        _
    $region28: #{bottleneck_forward.1} parent=5 // pred_fallthru
      _
    %p161 = scmp.le.s32.totalorder 1, %s10
    %p162 = scmp.lt.s32.totalorder %s10, 3
    %p163 = pnand %p161, %p162
    %p164 = pneg %p163
    // Predicated region
    $region33: #{bottleneck_forward.1} parent=5 // pred_check
      _
    $region34: #{bottleneck_forward.1} parent=5 // pred_check_branch
      %166 = sbr.rel (%p163) target = $region36
    $region35: #{bottleneck_forward.1} parent=5 // pred_region
      %s167 = ssub.s32 %s10, 1
      %p168 = scmp.lt.s32.totalorder %s15, 1
      %s169 = scalar_select %p168, %s15, 1
      %s170 = smul.addr %s169, 2
      %s171 = smul.addr %s170, 4
      %s172 = scalar_lea.vmem %s0, %s171
      %p173 = pneg %p36
      %p174 = pneg %p33
      %p175 = pneg %p57
      %p176 = pneg %p54
      %p177 = pneg %p78
      %p178 = pneg %p75
      %p179 = pneg %p99
      %p180 = pneg %p96
      %p181 = pneg %p125
      %p182 = pneg %p122
      %p183 = scmp.lt.s32.totalorder %s15, 1
      %s184 = scalar_select %p183, %s15, 1
      %s185 = smul.addr %s184, 2
      %s186 = smul.addr %s185, 4
      %s187 = scalar_lea.vmem %s4, %s186
      %p188 = scmp.lt.s32.totalorder %s15, 1
      %s189 = scalar_select %p188, %s15, 1
      %s190 = smul.addr %s189, 2
      %s191 = smul.addr %s190, 4
      %s192 = scalar_lea.vmem %s0, %s191
      %p193 = scmp.lt.s32.totalorder %s15, 1
      %s194 = scalar_select %p193, %s15, 1
      %s195 = smul.addr %s194, 2
      %s196 = smul.addr %s195, 4
      %s197 = scalar_lea.vmem %s4, %s196
      %v199 = vld [vmem:[%s3] ss:$2 sm:$0x3]
      %s200 = scalar_lea.vmem %s3, 1
      %v201 = vld [vmem:[%s200] ss:$2 sm:$0x3]
      %202 = vst [vmem:[#allocation2] sm:$0xf] 0.0
      %203 = vst [vmem:[#allocation2 + $0xc] sm:$0xf] 0.0
      %v204 = vld [vmem:[%s192] sm:$0xff]
      %205 = vst [vmem:[#allocation2 + $0x4] sm:$0xff] %v204
      %v206 = vld [vmem:[#allocation2] sm:$0xff]
      %v207 = vld [vmem:[#allocation2 + $0x8] sm:$0xf]
      %v209 = vperm.slane %v199, 0
      %v210 = vperm.slane %v199, 1
      %v211 = vrot.slane %v210, 4
      %vm212 = vcmask 1043456
      %v213 = vsel %vm212, %v209, %v211
      %214 = vrot.lane.b32.xlu0 %v213, 111
      %v215 = vpop.permute.xlu0 %214
      %v216 = vrot.slane %v215, 4
      %vm217 = vcmask 908288
      %v218 = vsel %vm217, %v216, %v215
      %v221 = vmul.f32 %v206, %v218
      %v222 = vmul.f32 %v207, %v216
      %v224 = vperm.slane %v201, 0
      %v225 = vperm.slane %v201, 1
      %v226 = vrot.slane %v225, 4
      %v227 = vsel %vm212, %v224, %v226
      %228 = vrot.lane.b32.xlu0 %v227, 113
      %v229 = vpop.permute.xlu0 %228
      %v230 = vrot.slane %v229, 4
      %vm231 = vcmask 924672
      %v232 = vsel %vm231, %v230, %v229
      %v235 = vmul.f32 %v206, %v232
      %v236 = vmul.f32 %v207, %v230
      %237 = vrot.lane.b32.xlu0 %v213, 127
      %v238 = vpop.permute.xlu0 %237
      %v239 = vrot.slane %v238, 4
      %vm240 = vcmask 1039360
      %v241 = vsel %vm240, %v239, %v238
      %v244 = vmul.f32 %v206, %v241
      %v245 = vmul.f32 %v207, %v239
      %v246 = vld [vmem:[#allocation2 + $0x4] sm:$0xff]
      %v247 = vld [vmem:[#allocation2 + $0x4] sm:$0xff]
      %v248 = vld [vmem:[#allocation2 + $0xc] sm:$0xf]
      %249 = vrot.lane.b32.xlu0 %v227, 1
      %v250 = vpop.permute.xlu0 %249
      %v251 = vrot.slane %v250, 4
      %vm252 = vcmask 7168
      %v253 = vsel %vm252, %v251, %v250
      %v256 = vmul.f32 %v247, %v253
      %v257 = vmul.f32 %v248, %v251
      %258 = vrot.lane.b32.xlu0 %v213, 15
      %v259 = vpop.permute.xlu0 %258
      %v260 = vrot.slane %v259, 4
      %vm261 = vcmask 121856
      %v262 = vsel %vm261, %v260, %v259
      %v265 = vmul.f32 %v247, %v262
      %v266 = vmul.f32 %v248, %v260
      %267 = vrot.lane.b32.xlu0 %v227, 17
      %v268 = vpop.permute.xlu0 %267
      %v269 = vrot.slane %v268, 4
      %vm270 = vcmask 138240
      %v271 = vsel %vm270, %v269, %v268
      %v274 = vmul.f32 %v247, %v271
      %v275 = vmul.f32 %v248, %v269
      %278 = vst [vmem:[#allocation1] ss:$2 sm:$0xff] %v221
      %s279 = scalar_lea.vmem [#allocation1], 16
      %280 = vst [vmem:[%s279] ss:$2 sm:$0xff] %v222
      %v281 = vld.sshfl [vmem:[#allocation1] sm:$0xff pattern:$0x75316420]
      %v282 = vld.sshfl [vmem:[#allocation1 + $0x8] sm:$0xff pattern:$0x75316420]
      %v283 = vld.sshfl [vmem:[#allocation1 + $0x10] sm:$0xff pattern:$0x75316420]
      %v284 = vrot.slane %v281, 7
      %v285 = vrot.slane %v282, 7
      %v286 = vrot.slane %v283, 7
      %287 = vrot.lane.b32.xlu0 %v284, 17
      %v288 = vpop.permute.xlu0 %287
      %289 = vrot.lane.b32.xlu0 %v285, 17
      %v290 = vpop.permute.xlu0 %289
      %291 = vrot.lane.b32.xlu0 %v286, 17
      %v292 = vpop.permute.xlu0 %291
      %v293 = vsel %vm270, %v288, %v290
      %v294 = vsel %vm270, %v290, %v292
      %299 = vst [vmem:[#allocation1] ss:$2 sm:$0xff] %v206
      %s300 = scalar_lea.vmem [#allocation1], 16
      %301 = vst [vmem:[%s300] ss:$2 sm:$0xff] %v207
      %v302 = vld.sshfl [vmem:[#allocation1] sm:$0xff pattern:$0x75316420]
      %v303 = vld.sshfl [vmem:[#allocation1 + $0x8] sm:$0xff pattern:$0x75316420]
      %v304 = vld.sshfl [vmem:[#allocation1 + $0x10] sm:$0xff pattern:$0x75316420]
      %v305 = vrot.slane %v302, 3
      %v306 = vrot.slane %v303, 3
      %v307 = vrot.slane %v304, 3
      %308 = vrot.lane.b32.xlu0 %v305, 16
      %v309 = vpop.permute.xlu0 %308
      %310 = vrot.lane.b32.xlu0 %v306, 16
      %v311 = vpop.permute.xlu0 %310
      %312 = vrot.lane.b32.xlu0 %v307, 16
      %v313 = vpop.permute.xlu0 %312
      %vm314 = vcmask 130048
      %v315 = vsel %vm314, %v309, %v311
      %v316 = vsel %vm314, %v311, %v313
      %321 = vst [vmem:[#allocation1] ss:$2 sm:$0xff] %v235
      %s322 = scalar_lea.vmem [#allocation1], 16
      %323 = vst [vmem:[%s322] ss:$2 sm:$0xff] %v236
      %v324 = vld.sshfl [vmem:[#allocation1] sm:$0xff pattern:$0x75316420]
      %v325 = vld.sshfl [vmem:[#allocation1 + $0x8] sm:$0xff pattern:$0x75316420]
      %v326 = vld.sshfl [vmem:[#allocation1 + $0x10] sm:$0xff pattern:$0x75316420]
      %v327 = vrot.slane %v324, 7
      %v328 = vrot.slane %v325, 7
      %v329 = vrot.slane %v326, 7
      %330 = vrot.lane.b32.xlu0 %v327, 15
      %v331 = vpop.permute.xlu0 %330
      %332 = vrot.lane.b32.xlu0 %v328, 15
      %v333 = vpop.permute.xlu0 %332
      %334 = vrot.lane.b32.xlu0 %v329, 15
      %v335 = vpop.permute.xlu0 %334
      %v336 = vsel %vm261, %v331, %v333
      %v337 = vsel %vm261, %v333, %v335
      %342 = vst [vmem:[#allocation1] ss:$2 sm:$0xff] %v244
      %s343 = scalar_lea.vmem [#allocation1], 16
      %344 = vst [vmem:[%s343] ss:$2 sm:$0xff] %v245
      %v345 = vld.sshfl [vmem:[#allocation1] sm:$0xff pattern:$0x75316420]
      %v346 = vld.sshfl [vmem:[#allocation1 + $0x8] sm:$0xff pattern:$0x75316420]
      %v347 = vld.sshfl [vmem:[#allocation1 + $0x10] sm:$0xff pattern:$0x75316420]
      %v348 = vrot.slane %v345, 3
      %v349 = vrot.slane %v346, 3
      %v350 = vrot.slane %v347, 3
      %351 = vrot.lane.b32.xlu0 %v348, 1
      %v352 = vpop.permute.xlu0 %351
      %353 = vrot.lane.b32.xlu0 %v349, 1
      %v354 = vpop.permute.xlu0 %353
      %355 = vrot.lane.b32.xlu0 %v350, 1
      %v356 = vpop.permute.xlu0 %355
      %v357 = vsel %vm252, %v352, %v354
      %v358 = vsel %vm252, %v354, %v356
      %362 = vst [vmem:[#allocation1] ss:$2 sm:$0xff] %v246
      %v363 = vld.sshfl [vmem:[#allocation1] sm:$0xff pattern:$0x75316420]
      %v364 = vld.sshfl [vmem:[#allocation1 + $0x8] sm:$0xff pattern:$0x75316420]
      %v365 = vrot.slane %v363, 7
      %v366 = vrot.slane %v364, 7
      %371 = vst [vmem:[#allocation1] ss:$2 sm:$0xff] %v256
      %s372 = scalar_lea.vmem [#allocation1], 16
      %373 = vst [vmem:[%s372] ss:$2 sm:$0xff] %v257
      %v374 = vld.sshfl [vmem:[#allocation1] sm:$0xff pattern:$0x75316420]
      %v375 = vld.sshfl [vmem:[#allocation1 + $0x8] sm:$0xff pattern:$0x75316420]
      %v376 = vld.sshfl [vmem:[#allocation1 + $0x10] sm:$0xff pattern:$0x75316420]
      %v377 = vrot.slane %v374, 3
      %v378 = vrot.slane %v375, 3
      %v379 = vrot.slane %v376, 3
      %380 = vrot.lane.b32.xlu0 %v377, 127
      %v381 = vpop.permute.xlu0 %380
      %382 = vrot.lane.b32.xlu0 %v378, 127
      %v383 = vpop.permute.xlu0 %382
      %384 = vrot.lane.b32.xlu0 %v379, 127
      %v385 = vpop.permute.xlu0 %384
      %v386 = vsel %vm240, %v381, %v383
      %v387 = vsel %vm240, %v383, %v385
      %392 = vst [vmem:[#allocation1] ss:$2 sm:$0xff] %v265
      %s393 = scalar_lea.vmem [#allocation1], 16
      %394 = vst [vmem:[%s393] ss:$2 sm:$0xff] %v266
      %v395 = vld.sshfl [vmem:[#allocation1] sm:$0xff pattern:$0x75316420]
      %v396 = vld.sshfl [vmem:[#allocation1 + $0x8] sm:$0xff pattern:$0x75316420]
      %v397 = vld.sshfl [vmem:[#allocation1 + $0x10] sm:$0xff pattern:$0x75316420]
      %v398 = vrot.slane %v395, 7
      %v399 = vrot.slane %v396, 7
      %v400 = vrot.slane %v397, 7
      %401 = vrot.lane.b32.xlu0 %v398, 113
      %v402 = vpop.permute.xlu0 %401
      %403 = vrot.lane.b32.xlu0 %v399, 113
      %v404 = vpop.permute.xlu0 %403
      %405 = vrot.lane.b32.xlu0 %v400, 113
      %v406 = vpop.permute.xlu0 %405
      %v407 = vsel %vm231, %v402, %v404
      %v408 = vsel %vm231, %v404, %v406
      %413 = vst [vmem:[#allocation1] ss:$2 sm:$0xff] %v247
      %s414 = scalar_lea.vmem [#allocation1], 16
      %415 = vst [vmem:[%s414] ss:$2 sm:$0xff] %v248
      %v416 = vld.sshfl [vmem:[#allocation1] sm:$0xff pattern:$0x75316420]
      %v417 = vld.sshfl [vmem:[#allocation1 + $0x8] sm:$0xff pattern:$0x75316420]
      %v418 = vld.sshfl [vmem:[#allocation1 + $0x10] sm:$0xff pattern:$0x75316420]
      %v419 = vrot.slane %v416, 3
      %v420 = vrot.slane %v417, 3
      %v421 = vrot.slane %v418, 3
      %422 = vrot.lane.b32.xlu0 %v419, 112
      %v423 = vpop.permute.xlu0 %422
      %424 = vrot.lane.b32.xlu0 %v420, 112
      %v425 = vpop.permute.xlu0 %424
      %426 = vrot.lane.b32.xlu0 %v421, 112
      %v427 = vpop.permute.xlu0 %426
      %vm428 = vcmask 916480
      %v429 = vsel %vm428, %v423, %v425
      %v430 = vsel %vm428, %v425, %v427
      %435 = vst [vmem:[#allocation1] ss:$2 sm:$0xff] %v274
      %s436 = scalar_lea.vmem [#allocation1], 16
      %437 = vst [vmem:[%s436] ss:$2 sm:$0xff] %v275
      %v438 = vld.sshfl [vmem:[#allocation1] sm:$0xff pattern:$0x75316420]
      %v439 = vld.sshfl [vmem:[#allocation1 + $0x8] sm:$0xff pattern:$0x75316420]
      %v440 = vld.sshfl [vmem:[#allocation1 + $0x10] sm:$0xff pattern:$0x75316420]
      %v441 = vrot.slane %v438, 7
      %v442 = vrot.slane %v439, 7
      %v443 = vrot.slane %v440, 7
      %444 = vrot.lane.b32.xlu0 %v441, 111
      %v445 = vpop.permute.xlu0 %444
      %446 = vrot.lane.b32.xlu0 %v442, 111
      %v447 = vpop.permute.xlu0 %446
      %448 = vrot.lane.b32.xlu0 %v443, 111
      %v449 = vpop.permute.xlu0 %448
      %v450 = vsel %vm217, %v445, %v447
      %v451 = vsel %vm217, %v447, %v449
      %vm454 = vcmask 1040384
      %v455 = vsel %vm454, 1.0, %v293
      %v456 = vsel %vm454, 1.0, %v294
      %vm457 = vcmask 1044480
      %v458 = vsel %vm457, %v455, %v315
      %v459 = vsel %vm457, %v456, %v316
      %v460 = vsel %vm454, %v315, %v336
      %v461 = vsel %vm454, %v316, %v337
      %v462 = vsel %vm457, %v460, %v357
      %v463 = vsel %vm457, %v461, %v358
      %v464 = vsel %vm454, %v357, %v365
      %v465 = vsel %vm454, %v358, %v366
      %v466 = vsel %vm457, %v464, %v386
      %v467 = vsel %vm457, %v465, %v387
      %v468 = vsel %vm454, %v386, %v407
      %v469 = vsel %vm454, %v387, %v408
      %v470 = vsel %vm457, %v468, %v429
      %v471 = vsel %vm457, %v469, %v430
      %v472 = vsel %vm454, %v429, %v450
      %v473 = vsel %vm454, %v430, %v451
      %v474 = vpack.c.bf16 %v462, %v458
      %v475 = vpack.c.bf16 %v463, %v459
      %v476 = vpack.c.bf16 %v470, %v466
      %v477 = vpack.c.bf16 %v471, %v467
      %v478 = vpack.c.bf16 %v472, %v472
      %v479 = vpack.c.bf16 %v473, %v473
      %v480 = vld [vmem:[%s1] sm:$0x1]
      %vm481 = vcmask 302080
      %v483 = vsel %vm481, %v480, 0
      %vm485 = vcmask 1041408
      %vm486 = vcmask 1042432
      %v487 = vsel %vm485, 4294967295, 65535
      %v488 = vsel %vm486, %v487, 0
      %v490 = vand.u32 %v478, %v488
      %v493 = vand.u32 %v479, %v488
      %495 = vmatpush.bf16.msra.mxu0 0
      %496 = vmatpush.bf16.msra.mxu0 0
      %497 = vmatpush.bf16.msra.mxu0 0
      %498 = vmatpush.bf16.msra.mxu0 0
      %499 = vmatpush.bf16.msra.mxu0 0
      %500 = vmatpush.bf16.msra.mxu0 %v490
      %501 = vmatpush.bf16.msra.mxu0 %v476
      %502 = vmatpush.bf16.msra.mxu0 %v474
      %503 = vmatmul.bf16.gmra.mxu0 %v483
      %v504 = vpop.f32.mrf.mxu0
      %v505 = vadd.f32 0.0, %v504
      %v506 = vpop.f32.mrf.mxu0
      %507 = vdwg.mxu0
      %508 = vmatpush.bf16.msra.mxu0 0
      %509 = vmatpush.bf16.msra.mxu0 0
      %510 = vmatpush.bf16.msra.mxu0 0
      %511 = vmatpush.bf16.msra.mxu0 0
      %512 = vmatpush.bf16.msra.mxu0 0
      %513 = vmatpush.bf16.msra.mxu0 %v493
      %514 = vmatpush.bf16.msra.mxu0 %v477
      %515 = vmatpush.bf16.msra.mxu0 %v475
      %516 = vmatmul.bf16.gmra.mxu0 %v483
      %v517 = vpop.f32.mrf.mxu0
      %v518 = vadd.f32 0.0, %v517
      %v519 = vpop.f32.mrf.mxu0
      %520 = vdwg.mxu0
      %v521 = vxor.u32 %v505, 2147483648
      %v522 = vxor.u32 %v518, 2147483648
      %v523 = vmul.f32 %v521, 1.442695
      %v524 = vpow.pop %v523
      %v525 = vmul.f32 %v522, 1.442695
      %v526 = vpow.pop %v525
      %v527 = vadd.f32 %v524, 1.0
      %v528 = vadd.f32 %v526, 1.0
      %v529 = vrcp.pop %v527
      %v530 = vmul.f32 %v527, %v529
      %v531 = vsub.f32 1.0, %v530
      %v532 = vmul.f32 %v529, %v531
      %v533 = vadd.f32 %v529, %v532
      %vm534 = vweird.f32 %v527
      %vm535 = vweird.f32 %v529
      %vm536 = vmor %vm534, %vm535
      %v537 = vsel %vm536, %v529, %v533
      %v538 = vand.u32 2147483647, %v527
      %vm539 = vcmp.eq.f32.partialorder %v538, 8.507059e+37
      %v540 = vand.u32 %v527, 2147483648
      %v541 = vor.u32 1.1754944e-38, %v540
      %v542 = vsel %vm539, %v541, %v537
      %v543 = vmul.f32 1.0, %v542
      %v544 = vrcp.pop %v528
      %v545 = vmul.f32 %v528, %v544
      %v546 = vsub.f32 1.0, %v545
      %v547 = vmul.f32 %v544, %v546
      %v548 = vadd.f32 %v544, %v547
      %vm549 = vweird.f32 %v528
      %vm550 = vweird.f32 %v544
      %vm551 = vmor %vm549, %vm550
      %v552 = vsel %vm551, %v544, %v548
      %v553 = vand.u32 2147483647, %v528
      %vm554 = vcmp.eq.f32.partialorder %v553, 8.507059e+37
      %v555 = vand.u32 %v528, 2147483648
      %v556 = vor.u32 1.1754944e-38, %v555
      %v557 = vsel %vm554, %v556, %v552
      %v558 = vmul.f32 1.0, %v557
      %v559 = vmul.f32 %v505, %v543
      %v560 = vmul.f32 %v518, %v558
      %v563 = vrot.slane %v560, 4
      %v564 = vsel %vm212, %v559, %v563
      %566 = vst [vmem:[#allocation2 + $0x4] sm:$0x33] %v564
      %v567 = vld [vmem:[#allocation2] sm:$0x33]
      %v568 = vld [vmem:[#allocation2 + $0x8] sm:$0x3]
      %v569 = vmul.f32 %v567, %v218
      %v570 = vmul.f32 %v568, %v216
      %v571 = vmul.f32 %v567, %v232
      %v572 = vmul.f32 %v568, %v230
      %v573 = vmul.f32 %v567, %v241
      %v574 = vmul.f32 %v568, %v239
      %v575 = vld [vmem:[#allocation2 + $0x4] sm:$0x33]
      %v576 = vld [vmem:[#allocation2 + $0x4] sm:$0x33]
      %v577 = vld [vmem:[#allocation2 + $0xc] sm:$0x3]
      %v578 = vmul.f32 %v576, %v253
      %v579 = vmul.f32 %v577, %v251
      %v580 = vmul.f32 %v576, %v262
      %v581 = vmul.f32 %v577, %v260
      %v582 = vmul.f32 %v576, %v271
      %v583 = vmul.f32 %v577, %v269
      %586 = vst [vmem:[#allocation1] ss:$2 sm:$0xff] %v569
      %s587 = scalar_lea.vmem [#allocation1], 16
      %588 = vst [vmem:[%s587] ss:$2 sm:$0xff] %v570
      %v589 = vld.sshfl [vmem:[#allocation1] sm:$0xff pattern:$0x75316420]
      %v590 = vld.sshfl [vmem:[#allocation1 + $0x8] sm:$0xff pattern:$0x75316420]
      %v591 = vld.sshfl [vmem:[#allocation1 + $0x10] sm:$0xff pattern:$0x75316420]
      %v592 = vrot.slane %v589, 7
      %v593 = vrot.slane %v590, 7
      %v594 = vrot.slane %v591, 7
      %595 = vrot.lane.b32.xlu0 %v592, 17
      %v596 = vpop.permute.xlu0 %595
      %597 = vrot.lane.b32.xlu0 %v593, 17
      %v598 = vpop.permute.xlu0 %597
      %599 = vrot.lane.b32.xlu0 %v594, 17
      %v600 = vpop.permute.xlu0 %599
      %v601 = vsel %vm270, %v596, %v598
      %v602 = vsel %vm270, %v598, %v600
      %607 = vst [vmem:[#allocation1] ss:$2 sm:$0xff] %v567
      %s608 = scalar_lea.vmem [#allocation1], 16
      %609 = vst [vmem:[%s608] ss:$2 sm:$0xff] %v568
      %v610 = vld.sshfl [vmem:[#allocation1] sm:$0xff pattern:$0x75316420]
      %v611 = vld.sshfl [vmem:[#allocation1 + $0x8] sm:$0xff pattern:$0x75316420]
      %v612 = vld.sshfl [vmem:[#allocation1 + $0x10] sm:$0xff pattern:$0x75316420]
      %v613 = vrot.slane %v610, 5
      %v614 = vrot.slane %v611, 5
      %v615 = vrot.slane %v612, 5
      %616 = vrot.lane.b32.xlu0 %v613, 16
      %v617 = vpop.permute.xlu0 %616
      %618 = vrot.lane.b32.xlu0 %v614, 16
      %v619 = vpop.permute.xlu0 %618
      %620 = vrot.lane.b32.xlu0 %v615, 16
      %v621 = vpop.permute.xlu0 %620
      %v622 = vsel %vm314, %v617, %v619
      %v623 = vsel %vm314, %v619, %v621
      %628 = vst [vmem:[#allocation1] ss:$2 sm:$0xff] %v571
      %s629 = scalar_lea.vmem [#allocation1], 16
      %630 = vst [vmem:[%s629] ss:$2 sm:$0xff] %v572
      %v631 = vld.sshfl [vmem:[#allocation1] sm:$0xff pattern:$0x75316420]
      %v632 = vld.sshfl [vmem:[#allocation1 + $0x8] sm:$0xff pattern:$0x75316420]
      %v633 = vld.sshfl [vmem:[#allocation1 + $0x10] sm:$0xff pattern:$0x75316420]
      %v634 = vrot.slane %v631, 3
      %v635 = vrot.slane %v632, 3
      %v636 = vrot.slane %v633, 3
      %637 = vrot.lane.b32.xlu0 %v634, 15
      %v638 = vpop.permute.xlu0 %637
      %639 = vrot.lane.b32.xlu0 %v635, 15
      %v640 = vpop.permute.xlu0 %639
      %641 = vrot.lane.b32.xlu0 %v636, 15
      %v642 = vpop.permute.xlu0 %641
      %v643 = vsel %vm261, %v638, %v640
      %v644 = vsel %vm261, %v640, %v642
      %649 = vst [vmem:[#allocation1] ss:$2 sm:$0xff] %v573
      %s650 = scalar_lea.vmem [#allocation1], 16
      %651 = vst [vmem:[%s650] ss:$2 sm:$0xff] %v574
      %v652 = vld.sshfl [vmem:[#allocation1] sm:$0xff pattern:$0x75316420]
      %v653 = vld.sshfl [vmem:[#allocation1 + $0x8] sm:$0xff pattern:$0x75316420]
      %v654 = vld.sshfl [vmem:[#allocation1 + $0x10] sm:$0xff pattern:$0x75316420]
      %v655 = vrot.slane %v652, 1
      %v656 = vrot.slane %v653, 1
      %v657 = vrot.slane %v654, 1
      %658 = vrot.lane.b32.xlu0 %v655, 1
      %v659 = vpop.permute.xlu0 %658
      %660 = vrot.lane.b32.xlu0 %v656, 1
      %v661 = vpop.permute.xlu0 %660
      %662 = vrot.lane.b32.xlu0 %v657, 1
      %v663 = vpop.permute.xlu0 %662
      %v664 = vsel %vm252, %v659, %v661
      %v665 = vsel %vm252, %v661, %v663
      %669 = vst [vmem:[#allocation1] ss:$2 sm:$0xff] %v575
      %v670 = vld.sshfl [vmem:[#allocation1] sm:$0xff pattern:$0x75316420]
      %v671 = vld.sshfl [vmem:[#allocation1 + $0x8] sm:$0xff pattern:$0x75316420]
      %v672 = vrot.slane %v670, 7
      %v673 = vrot.slane %v671, 7
      %678 = vst [vmem:[#allocation1] ss:$2 sm:$0xff] %v578
      %s679 = scalar_lea.vmem [#allocation1], 16
      %680 = vst [vmem:[%s679] ss:$2 sm:$0xff] %v579
      %v681 = vld.sshfl [vmem:[#allocation1] sm:$0xff pattern:$0x75316420]
      %v682 = vld.sshfl [vmem:[#allocation1 + $0x8] sm:$0xff pattern:$0x75316420]
      %v683 = vld.sshfl [vmem:[#allocation1 + $0x10] sm:$0xff pattern:$0x75316420]
      %v684 = vrot.slane %v681, 5
      %v685 = vrot.slane %v682, 5
      %v686 = vrot.slane %v683, 5
      %687 = vrot.lane.b32.xlu0 %v684, 127
      %v688 = vpop.permute.xlu0 %687
      %689 = vrot.lane.b32.xlu0 %v685, 127
      %v690 = vpop.permute.xlu0 %689
      %691 = vrot.lane.b32.xlu0 %v686, 127
      %v692 = vpop.permute.xlu0 %691
      %v693 = vsel %vm240, %v688, %v690
      %v694 = vsel %vm240, %v690, %v692
      %699 = vst [vmem:[#allocation1] ss:$2 sm:$0xff] %v580
      %s700 = scalar_lea.vmem [#allocation1], 16
      %701 = vst [vmem:[%s700] ss:$2 sm:$0xff] %v581
      %v702 = vld.sshfl [vmem:[#allocation1] sm:$0xff pattern:$0x75316420]
      %v703 = vld.sshfl [vmem:[#allocation1 + $0x8] sm:$0xff pattern:$0x75316420]
      %v704 = vld.sshfl [vmem:[#allocation1 + $0x10] sm:$0xff pattern:$0x75316420]
      %v705 = vrot.slane %v702, 3
      %v706 = vrot.slane %v703, 3
      %v707 = vrot.slane %v704, 3
      %708 = vrot.lane.b32.xlu0 %v705, 113
      %v709 = vpop.permute.xlu0 %708
      %710 = vrot.lane.b32.xlu0 %v706, 113
      %v711 = vpop.permute.xlu0 %710
      %712 = vrot.lane.b32.xlu0 %v707, 113
      %v713 = vpop.permute.xlu0 %712
      %v714 = vsel %vm231, %v709, %v711
      %v715 = vsel %vm231, %v711, %v713
      %720 = vst [vmem:[#allocation1] ss:$2 sm:$0xff] %v576
      %s721 = scalar_lea.vmem [#allocation1], 16
      %722 = vst [vmem:[%s721] ss:$2 sm:$0xff] %v577
      %v723 = vld.sshfl [vmem:[#allocation1] sm:$0xff pattern:$0x75316420]
      %v724 = vld.sshfl [vmem:[#allocation1 + $0x8] sm:$0xff pattern:$0x75316420]
      %v725 = vld.sshfl [vmem:[#allocation1 + $0x10] sm:$0xff pattern:$0x75316420]
      %v726 = vrot.slane %v723, 1
      %v727 = vrot.slane %v724, 1
      %v728 = vrot.slane %v725, 1
      %729 = vrot.lane.b32.xlu0 %v726, 112
      %v730 = vpop.permute.xlu0 %729
      %731 = vrot.lane.b32.xlu0 %v727, 112
      %v732 = vpop.permute.xlu0 %731
      %733 = vrot.lane.b32.xlu0 %v728, 112
      %v734 = vpop.permute.xlu0 %733
      %v735 = vsel %vm428, %v730, %v732
      %v736 = vsel %vm428, %v732, %v734
      %741 = vst [vmem:[#allocation1] ss:$2 sm:$0xff] %v582
      %s742 = scalar_lea.vmem [#allocation1], 16
      %743 = vst [vmem:[%s742] ss:$2 sm:$0xff] %v583
      %v744 = vld.sshfl [vmem:[#allocation1] sm:$0xff pattern:$0x75316420]
      %v745 = vld.sshfl [vmem:[#allocation1 + $0x8] sm:$0xff pattern:$0x75316420]
      %v746 = vld.sshfl [vmem:[#allocation1 + $0x10] sm:$0xff pattern:$0x75316420]
      %v747 = vrot.slane %v744, 7
      %v748 = vrot.slane %v745, 7
      %v749 = vrot.slane %v746, 7
      %750 = vrot.lane.b32.xlu0 %v747, 111
      %v751 = vpop.permute.xlu0 %750
      %752 = vrot.lane.b32.xlu0 %v748, 111
      %v753 = vpop.permute.xlu0 %752
      %754 = vrot.lane.b32.xlu0 %v749, 111
      %v755 = vpop.permute.xlu0 %754
      %v756 = vsel %vm217, %v751, %v753
      %v757 = vsel %vm217, %v753, %v755
      %v760 = vsel %vm454, 1.0, %v601
      %v761 = vsel %vm454, 1.0, %v602
      %v762 = vsel %vm486, %v760, %v622
      %v763 = vsel %vm486, %v761, %v623
      %v764 = vsel %vm457, %v762, %v643
      %v765 = vsel %vm457, %v763, %v644
      %vm766 = vcmask 1046528
      %v767 = vsel %vm766, %v764, %v664
      %v768 = vsel %vm766, %v765, %v665
      %v769 = vsel %vm454, %v664, %v672
      %v770 = vsel %vm454, %v665, %v673
      %v771 = vsel %vm486, %v769, %v693
      %v772 = vsel %vm486, %v770, %v694
      %v773 = vsel %vm457, %v771, %v714
      %v774 = vsel %vm457, %v772, %v715
      %v775 = vsel %vm766, %v773, %v735
      %v776 = vsel %vm766, %v774, %v736
      %v777 = vsel %vm454, %v735, %v756
      %v778 = vsel %vm454, %v736, %v757
      %v779 = vpack.c.bf16 %v775, %v767
      %v780 = vpack.c.bf16 %v776, %v768
      %v781 = vpack.c.bf16 %v777, %v777
      %v782 = vpack.c.bf16 %v778, %v778
      %v783 = vld [vmem:[%s2] sm:$0x3]
      %vm784 = vcmask 154624
      %v786 = vsel %vm784, %v783, 0
      %v788 = vsel %vm454, 4294967295, 65535
      %v789 = vsel %vm485, %v788, 0
      %v791 = vand.u32 %v781, %v789
      %v794 = vand.u32 %v782, %v789
      %796 = vmatpush.bf16.msra.mxu0 0
      %797 = vmatpush.bf16.msra.mxu0 0
      %798 = vmatpush.bf16.msra.mxu0 0
      %799 = vmatpush.bf16.msra.mxu0 0
      %800 = vmatpush.bf16.msra.mxu0 0
      %801 = vmatpush.bf16.msra.mxu0 0
      %802 = vmatpush.bf16.msra.mxu0 %v791
      %803 = vmatpush.bf16.msra.mxu0 %v779
      %804 = vmatmul.bf16.gmra.mxu0 %v786
      %v805 = vpop.f32.mrf.mxu0
      %v806 = vadd.f32 0.0, %v805
      %v807 = vpop.f32.mrf.mxu0
      %808 = vdwg.mxu0
      %809 = vmatpush.bf16.msra.mxu0 0
      %810 = vmatpush.bf16.msra.mxu0 0
      %811 = vmatpush.bf16.msra.mxu0 0
      %812 = vmatpush.bf16.msra.mxu0 0
      %813 = vmatpush.bf16.msra.mxu0 0
      %814 = vmatpush.bf16.msra.mxu0 0
      %815 = vmatpush.bf16.msra.mxu0 %v794
      %816 = vmatpush.bf16.msra.mxu0 %v780
      %817 = vmatmul.bf16.gmra.mxu0 %v786
      %v818 = vpop.f32.mrf.mxu0
      %v819 = vadd.f32 0.0, %v818
      %v820 = vpop.f32.mrf.mxu0
      %821 = vdwg.mxu0
      %v822 = vxor.u32 %v806, 2147483648
      %v823 = vxor.u32 %v819, 2147483648
      %v824 = vmul.f32 %v822, 1.442695
      %v825 = vpow.pop %v824
      %v826 = vmul.f32 %v823, 1.442695
      %v827 = vpow.pop %v826
      %v828 = vadd.f32 %v825, 1.0
      %v829 = vadd.f32 %v827, 1.0
      %v830 = vrcp.pop %v828
      %v831 = vmul.f32 %v828, %v830
      %v832 = vsub.f32 1.0, %v831
      %v833 = vmul.f32 %v830, %v832
      %v834 = vadd.f32 %v830, %v833
      %vm835 = vweird.f32 %v828
      %vm836 = vweird.f32 %v830
      %vm837 = vmor %vm835, %vm836
      %v838 = vsel %vm837, %v830, %v834
      %v839 = vand.u32 2147483647, %v828
      %vm840 = vcmp.eq.f32.partialorder %v839, 8.507059e+37
      %v841 = vand.u32 %v828, 2147483648
      %v842 = vor.u32 1.1754944e-38, %v841
      %v843 = vsel %vm840, %v842, %v838
      %v844 = vmul.f32 1.0, %v843
      %v845 = vrcp.pop %v829
      %v846 = vmul.f32 %v829, %v845
      %v847 = vsub.f32 1.0, %v846
      %v848 = vmul.f32 %v845, %v847
      %v849 = vadd.f32 %v845, %v848
      %vm850 = vweird.f32 %v829
      %vm851 = vweird.f32 %v845
      %vm852 = vmor %vm850, %vm851
      %v853 = vsel %vm852, %v845, %v849
      %v854 = vand.u32 2147483647, %v829
      %vm855 = vcmp.eq.f32.partialorder %v854, 8.507059e+37
      %v856 = vand.u32 %v829, 2147483648
      %v857 = vor.u32 1.1754944e-38, %v856
      %v858 = vsel %vm855, %v857, %v853
      %v859 = vmul.f32 1.0, %v858
      %v860 = vmul.f32 %v806, %v844
      %v861 = vmul.f32 %v819, %v859
      %863 = vst [vmem:[#allocation1] ss:$2 sm:$0xff] %v204
      %v864 = vld.sshfl [vmem:[#allocation1] sm:$0xff pattern:$0x75316420]
      %v865 = vld.sshfl [vmem:[#allocation1 + $0x8] sm:$0xff pattern:$0x75316420]
      %v868 = vadd.f32 %v860, %v864
      %v869 = vadd.f32 %v861, %v865
      %v872 = vrot.slane %v869, 4
      %v873 = vsel %vm212, %v868, %v872
      %875 = vst [vmem:[%s197] sm:$0xff] %v873
      %p876 = scmp.lt.s32.totalorder %s15, 1
      %s877 = scalar_select %p876, %s15, 1
      %s878 = smul.addr %s877, 2
      %s879 = smul.addr %s878, 4
      %s880 = scalar_lea.vmem %s4, %s879
      // Predicated region
      $region37: #{bottleneck_forward.1} parent=35 // pred_check
        %p881 = pneg %p122
      $region38: #{bottleneck_forward.1} parent=35 // pred_check_branch
        %883 = sbr.rel (%p881) target = $region40
      $region39: #{bottleneck_forward.1} parent=35 // pred_region
        _
      $region40: #{bottleneck_forward.1} parent=35 // pred_fallthru
        _
    $region36: #{bottleneck_forward.1} parent=5 // pred_fallthru
      _
    %p884 = scmp.le.s32.totalorder 2, %s10
    // Predicated region
    $region41: #{bottleneck_forward.1} parent=5 // pred_check
      %p885 = pneg %p884
    $region42: #{bottleneck_forward.1} parent=5 // pred_check_branch
      %887 = sbr.rel (%p885) target = $region44
    $region43: #{bottleneck_forward.1} parent=5 // pred_region
      %s888 = ssub.s32 %s10, 2
      // Predicated region
      $region45: #{bottleneck_forward.1} parent=43 // pred_check
        %p889 = pneg %p128
      $region46: #{bottleneck_forward.1} parent=43 // pred_check_branch
        %891 = sbr.rel (%p889) target = $region48
      $region47: #{bottleneck_forward.1} parent=43 // pred_region
        %p892 = scmp.lt.s32.totalorder %s16, 1
        %s893 = scalar_select %p892, %s16, 1
        %s894 = smul.addr %s893, 2
        %s895 = smul.addr %s894, 4
        %s896 = scalar_lea.vmem %s4, %s895
      $region48: #{bottleneck_forward.1} parent=43 // pred_fallthru
        _
    $region44: #{bottleneck_forward.1} parent=5 // pred_fallthru
      _
  $region6: #{bottleneck_forward.1} parent=0 // loop_footer
    %s14 = sadd.s32 1, %s10
  $region7: #{bottleneck_forward.1} parent=0 // loop_footer_branch
    %9 = sbr.rel target = $region3
  $region8: #{bottleneck_forward.1} parent=0 // loop_exit
    _

</llo_original>
